<compile_context>
chip_gen: v5e
topology: v5e:2x2
jax: 0.10.0
libtpu: 0.0.40
codegen_flags: <defaults>
</compile_context>

<pallas_src>
import functools

import jax
import jax.numpy as jnp
from jax.experimental import pallas as pl
from jax.experimental.pallas import tpu as pltpu


_LANE = 128
_MIB = 1024 * 1024
_SMALL_HW_PAD_THRESHOLD = 256   # pad the lane axis only for tiny spatial extents


def _round_up(x, m):
    return ((x + m - 1) // m) * m


def _tpu_vmem_bytes():
    try:
        info = pltpu.get_tpu_info()
        return int(getattr(info, "vmem_capacity_bytes", 64 * _MIB))
    except Exception:
        return 64 * _MIB


def _block_target_bytes(vmem_bytes):
    # ~6 MiB blocks on 64 MiB/TC parts (v7x), ~12 MiB on 128 MiB parts (v5e/v6e).
    return 6 * _MIB if vmem_bytes <= 96 * _MIB else 12 * _MIB


def _vmem_limit(block_in_bytes, block_f32_bytes, vmem_bytes):
    # 2x double-buffered input + 2x double-buffered output + in-kernel f32 temps
    # + margin for weights / compiler scratch.
    needed = 4 * block_in_bytes + 2 * block_f32_bytes + 4 * _MIB
    return int(min(max(needed, 32 * _MIB), int(vmem_bytes * 0.85)))


# ---------------------------------------------------------------------------
# Single-pass kernel: whole (C, HW) row(s) per block.
# ---------------------------------------------------------------------------
def _cw_attn_kernel(x_ref, w1t_ref, b1_ref, w2t_ref, b2_ref, o_ref, *, inv_hw):
    # x_ref:   (Bt, C, HWe)   lane axis = spatial
    # w1t_ref: (C, SQ), b1_ref: (1, SQ), w2t_ref: (SQ, C), b2_ref: (1, C)
    # o_ref:   (Bt, C, HWe)

    # Global average pool over spatial lanes -> (Bt, C).  The f32 slab used for
    # the sum is not kept live across the rest of the kernel.
    gap = jnp.sum(x_ref[...].astype(jnp.float32), axis=-1) * inv_hw

    # fc1 (1x1 conv) + ReLU -> (Bt, SQ)
    s = jnp.dot(gap, w1t_ref[...], preferred_element_type=jnp.float32) + b1_ref[...]
    s = jnp.maximum(s, 0.0)

    # fc2 (1x1 conv) + sigmoid -> (Bt, C)
    e = jax.nn.sigmoid(
        jnp.dot(s, w2t_ref[...], preferred_element_type=jnp.float32) + b2_ref[...])

    # Per-channel scale broadcast over spatial lanes (no in-kernel transposes).
    o_ref[...] = (x_ref[...].astype(jnp.float32) * e[:, :, None]).astype(o_ref.dtype)


def _single_pass(x_flat, w1t, b1_2d, w2t, b2_2d, N, C, SQ, HW,
                 block_target, vmem_bytes, out_dtype):
    itemsize = jnp.dtype(out_dtype).itemsize

    # Pad the lane axis to a 128 multiple only for tiny HW; otherwise pass HW
    # unpadded (block last dim == full array dim is legal; tail stores masked).
    pad_hw = (HW % _LANE != 0) and (HW < _SMALL_HW_PAD_THRESHOLD)
    HW_eff = _round_up(HW, _LANE) if pad_hw else HW
    if pad_hw:
        x_flat = jnp.pad(x_flat, ((0, 0), (0, 0), (0, HW_eff - HW)))

    per_elem_bytes = C * HW_eff * itemsize
    bt = max(1, min(N, block_target // max(per_elem_bytes, 1)))
    if N >= 2:
        # Keep at least 2 grid steps so the "parallel" axis can shard across
        # v7x's two TensorCores.
        bt = min(bt, -(-N // 2))
    grid = -(-N // bt)   # ragged last block is fine: per-row op, masked writeback

    block_in = bt * C * HW_eff * itemsize
    block_f32 = bt * C * HW_eff * 4

    kernel = functools.partial(_cw_attn_kernel, inv_hw=1.0 / HW)

    out_flat = pl.pallas_call(
        kernel,
        out_shape=jax.ShapeDtypeStruct((N, C, HW_eff), out_dtype),
        grid_spec=pltpu.PrefetchScalarGridSpec(
            num_scalar_prefetch=0,
            grid=(grid,),
            in_specs=[
                pl.BlockSpec((bt, C, HW_eff), lambda n: (n, 0, 0)),
                pl.BlockSpec((C, SQ), lambda n: (0, 0)),
                pl.BlockSpec((1, SQ), lambda n: (0, 0)),
                pl.BlockSpec((SQ, C), lambda n: (0, 0)),
                pl.BlockSpec((1, C), lambda n: (0, 0)),
            ],
            out_specs=pl.BlockSpec((bt, C, HW_eff), lambda n: (n, 0, 0)),
        ),
        compiler_params=pltpu.CompilerParams(
            dimension_semantics=("parallel",),
            vmem_limit_bytes=_vmem_limit(block_in, block_f32, vmem_bytes),
        ),
    )(x_flat, w1t, b1_2d, w2t, b2_2d)

    if pad_hw:
        out_flat = out_flat[:, :, :HW]
    return out_flat


# ---------------------------------------------------------------------------
# Two-pass fallback: one (C, HW) row does not fit the block budget.
# ---------------------------------------------------------------------------
def _gap_kernel(x_ref, gap_ref, acc_ref, *, inv_hw, hw_total, thw):
    # x_ref: (1, C, thw), gap_ref: (1, C, 1), acc_ref: VMEM (1, C, 1) f32
    h = pl.program_id(1)

    @pl.when(h == 0)
    def _():
        acc_ref[...] = jnp.zeros_like(acc_ref)

    x = x_ref[...].astype(jnp.float32)
    lane = jax.lax.broadcasted_iota(jnp.int32, x.shape, 2) + h * thw
    x = jnp.where(lane < hw_total, x, 0.0)          # mask ragged spatial tail
    acc_ref[...] += jnp.sum(x, axis=-1, keepdims=True)

    @pl.when(h == pl.num_programs(1) - 1)
    def _():
        gap_ref[...] = acc_ref[...] * inv_hw


def _scale_kernel(e_ref, x_ref, o_ref):
    # e_ref: (1, C, 1) f32, x_ref/o_ref: (1, C, thw)
    o_ref[...] = (x_ref[...].astype(jnp.float32) * e_ref[...]).astype(o_ref.dtype)


def _two_pass(x_flat, w1t, b1_2d, w2t, b2_2d, N, C, SQ, HW,
              block_target, vmem_bytes, out_dtype):
    itemsize = jnp.dtype(out_dtype).itemsize

    # Spatial tile: multiple of 128 lanes sized so one (1, C, thw) block hits
    # the block budget.
    thw = max(_LANE, (block_target // max(C * itemsize, 1)) // _LANE * _LANE)
    thw = min(thw, _round_up(HW, _LANE))
    n_hw = -(-HW // thw)

    block_in = C * thw * itemsize
    block_f32 = C * thw * 4
    vmem_limit = _vmem_limit(block_in, block_f32, vmem_bytes)

    # Pass 1: global average pool, tiled over the spatial axis.
    gap = pl.pallas_call(
        functools.partial(_gap_kernel, inv_hw=1.0 / HW, hw_total=HW, thw=thw),
        out_shape=jax.ShapeDtypeStruct((N, C, 1), jnp.float32),
        grid_spec=pltpu.PrefetchScalarGridSpec(
            num_scalar_prefetch=0,
            grid=(N, n_hw),
            in_specs=[pl.BlockSpec((1, C, thw), lambda n, h: (n, 0, h))],
            out_specs=pl.BlockSpec((1, C, 1), lambda n, h: (n, 0, 0)),
            scratch_shapes=[pltpu.VMEM((1, C, 1), jnp.float32)],
        ),
        compiler_params=pltpu.CompilerParams(
            dimension_semantics=("parallel", "arbitrary"),
            vmem_limit_bytes=vmem_limit,
        ),
    )(x_flat)

    # Tiny excitation MLP on (N, C): negligible next to the two HBM passes.
    gap2d = gap.reshape(N, C)
    s = jax.nn.relu(jnp.dot(gap2d, w1t, preferred_element_type=jnp.float32) + b1_2d)
    e = jax.nn.sigmoid(jnp.dot(s, w2t, preferred_element_type=jnp.float32) + b2_2d)
    e = e.reshape(N, C, 1).astype(jnp.float32)

    # Pass 2: per-channel scale, tiled over the spatial axis.
    out_flat = pl.pallas_call(
        _scale_kernel,
        out_shape=jax.ShapeDtypeStruct((N, C, HW), out_dtype),
        grid_spec=pltpu.PrefetchScalarGridSpec(
            num_scalar_prefetch=0,
            grid=(N, n_hw),
            in_specs=[
                pl.BlockSpec((1, C, 1), lambda n, h: (n, 0, 0)),
                pl.BlockSpec((1, C, thw), lambda n, h: (n, 0, h)),
            ],
            out_specs=pl.BlockSpec((1, C, thw), lambda n, h: (n, 0, h)),
        ),
        compiler_params=pltpu.CompilerParams(
            dimension_semantics=("parallel", "parallel"),
            vmem_limit_bytes=vmem_limit,
        ),
    )(e, x_flat)
    return out_flat


# ---------------------------------------------------------------------------
# Public wrapper
# ---------------------------------------------------------------------------
def channel_wise_attention(x, w1, b1, w2, b2, *, force_two_pass=False):
    """x: [N, C, H, W]; w1: [SQ, C] (fc1 weight), b1: [SQ]; w2: [C, SQ], b2: [C]."""
    N, C, H, W = x.shape
    SQ = w1.shape[0]
    HW = H * W
    itemsize = jnp.dtype(x.dtype).itemsize

    vmem_bytes = _tpu_vmem_bytes()
    block_target = _block_target_bytes(vmem_bytes)

    # One-off tiny host-side transposes (outside the per-step hot path).
    w1t = jnp.asarray(w1).T.astype(jnp.float32)          # (C, SQ)
    w2t = jnp.asarray(w2).T.astype(jnp.float32)          # (SQ, C)
    b1_2d = jnp.asarray(b1).reshape(1, SQ).astype(jnp.float32)
    b2_2d = jnp.asarray(b2).reshape(1, C).astype(jnp.float32)

    x_flat = x.reshape(N, C, HW)
    per_elem_bytes = C * HW * itemsize

    if per_elem_bytes <= block_target and not force_two_pass:
        out_flat = _single_pass(x_flat, w1t, b1_2d, w2t, b2_2d, N, C, SQ, HW,
                                block_target, vmem_bytes, x.dtype)
    else:
        out_flat = _two_pass(x_flat, w1t, b1_2d, w2t, b2_2d, N, C, SQ, HW,
                             block_target, vmem_bytes, x.dtype)
    return out_flat.reshape(N, C, H, W)


def _reference(x, w1, b1, w2, b2):
    gap = jnp.mean(x, axis=(2, 3), keepdims=True)                              # [N,C,1,1]
    s = jax.nn.relu(jnp.einsum('nchw,oc->nohw', gap, w1) + b1[None, :, None, None])
    e = jax.nn.sigmoid(jnp.einsum('nchw,oc->nohw', s, w2) + b2[None, :, None, None])
    return x * e


if __name__ == "__main__":
    # Shapes consistent with ChannelWiseAttention(input_dim=16, squeeze_factor=4)
    N, C, H, W = 2, 16, 16, 16
    SQ = C // 4

    key = jax.random.PRNGKey(0)
    kx, k1, k2, k3, k4 = jax.random.split(key, 5)
    x = jax.random.normal(kx, (N, C, H, W), dtype=jnp.float32)

    # Conv2d kernel_size=1 -> dense weights
    w1 = jax.random.normal(k1, (SQ, C), dtype=jnp.float32) * 0.1   # fc1.weight[SQ,C,1,1]
    b1 = jax.random.normal(k2, (SQ,), dtype=jnp.float32) * 0.1     # fc1.bias
    w2 = jax.random.normal(k3, (C, SQ), dtype=jnp.float32) * 0.1   # fc2.weight[C,SQ,1,1]
    b2 = jax.random.normal(k4, (C,), dtype=jnp.float32) * 0.1      # fc2.bias

    ref = jax.block_until_ready(_reference(x, w1, b1, w2, b2))

    # Main (single-pass) path.
    out = jax.block_until_ready(channel_wise_attention(x, w1, b1, w2, b2))
    assert out.shape == (N, C, H, W)
    assert jnp.allclose(out, ref, atol=1e-5, rtol=1e-5), "single-pass mismatch"

    # Also exercise the two-pass (large-feature-map) fallback on the same data.
    out2 = jax.block_until_ready(
        channel_wise_attention(x, w1, b1, w2, b2, force_two_pass=True))
    assert jnp.allclose(out2, ref, atol=1e-5, rtol=1e-5), "two-pass mismatch"

    print("KERNEL_OK")
</pallas_src>

<mosaic_0001>
module attributes {stable_mosaic.version = 11 : i64} {
  func.func @_cw_attn_kernel(%arg0: i32, %arg1: memref<1x16x256xf32, #tpu.memory_space<vmem>>, %arg2: memref<16x4xf32, #tpu.memory_space<vmem>>, %arg3: memref<1x4xf32, #tpu.memory_space<vmem>>, %arg4: memref<4x16xf32, #tpu.memory_space<vmem>>, %arg5: memref<1x16xf32, #tpu.memory_space<vmem>>, %arg6: memref<1x16x256xf32, #tpu.memory_space<vmem>>) attributes {dimension_semantics = [#tpu.dimension_semantics<parallel>], iteration_bounds = array<i64: 2>, scalar_prefetch = 0 : i64, scratch_operands = 0 : i64, tpu.core_type = #tpu.core_type<tc>, window_params = [{transform_indices = @transform_0, window_bounds = array<i64: 1, 16, 256>}, {pipeline_mode = #tpu.pipeline_mode<synchronous>, transform_indices = @transform_1, window_bounds = array<i64: 16, 4>}, {pipeline_mode = #tpu.pipeline_mode<synchronous>, transform_indices = @transform_2, window_bounds = array<i64: 1, 4>}, {pipeline_mode = #tpu.pipeline_mode<synchronous>, transform_indices = @transform_3, window_bounds = array<i64: 4, 16>}, {pipeline_mode = #tpu.pipeline_mode<synchronous>, transform_indices = @transform_4, window_bounds = array<i64: 1, 16>}, {transform_indices = @transform_5, window_bounds = array<i64: 1, 16, 256>}]} {
    %c0 = arith.constant 0 : index
    %c0_0 = arith.constant 0 : index
    %c0_1 = arith.constant 0 : index
    %0 = vector.load %arg1[%c0, %c0_0, %c0_1] : memref<1x16x256xf32, #tpu.memory_space<vmem>>, vector<1x16x256xf32>
    %cst = arith.constant dense<0.000000e+00> : vector<1x16xf32>
    %1 = vector.multi_reduction <add>, %0, %cst [2] : vector<1x16x256xf32> to vector<1x16xf32>
    %cst_2 = arith.constant 3.906250e-03 : f32
    %2 = vector.broadcast %cst_2 : f32 to vector<1x16xf32>
    %3 = arith.mulf %1, %2 : vector<1x16xf32>
    %c0_3 = arith.constant 0 : index
    %c0_4 = arith.constant 0 : index
    %4 = vector.load %arg2[%c0_3, %c0_4] : memref<16x4xf32, #tpu.memory_space<vmem>>, vector<16x4xf32>
    %cst_5 = arith.constant dense<0.000000e+00> : vector<1x4xf32>
    %5 = tpu.matmul %3, %4, %cst_5 {dimension_numbers = #tpu.dot_dimension_numbers<[1], [0], [0], [1], [0, 0, 1, 1], [], []>} : vector<1x16xf32>, vector<16x4xf32>, vector<1x4xf32> -> vector<1x4xf32>
    %c0_6 = arith.constant 0 : index
    %c0_7 = arith.constant 0 : index
    %6 = vector.load %arg3[%c0_6, %c0_7] : memref<1x4xf32, #tpu.memory_space<vmem>>, vector<1x4xf32>
    %7 = arith.addf %5, %6 : vector<1x4xf32>
    %cst_8 = arith.constant 0.000000e+00 : f32
    %8 = vector.broadcast %cst_8 : f32 to vector<1x4xf32>
    %9 = arith.maximumf %7, %8 : vector<1x4xf32>
    %c0_9 = arith.constant 0 : index
    %c0_10 = arith.constant 0 : index
    %10 = vector.load %arg4[%c0_9, %c0_10] : memref<4x16xf32, #tpu.memory_space<vmem>>, vector<4x16xf32>
    %cst_11 = arith.constant dense<0.000000e+00> : vector<1x16xf32>
    %11 = tpu.matmul %9, %10, %cst_11 {dimension_numbers = #tpu.dot_dimension_numbers<[1], [0], [0], [1], [0, 0, 1, 1], [], []>} : vector<1x4xf32>, vector<4x16xf32>, vector<1x16xf32> -> vector<1x16xf32>
    %c0_12 = arith.constant 0 : index
    %c0_13 = arith.constant 0 : index
    %12 = vector.load %arg5[%c0_12, %c0_13] : memref<1x16xf32, #tpu.memory_space<vmem>>, vector<1x16xf32>
    %13 = arith.addf %11, %12 : vector<1x16xf32>
    %14 = arith.negf %13 : vector<1x16xf32>
    %15 = math.exp %14 : vector<1x16xf32>
    %cst_14 = arith.constant 1.000000e+00 : f32
    %16 = vector.broadcast %cst_14 : f32 to vector<1x16xf32>
    %17 = arith.addf %16, %15 : vector<1x16xf32>
    %18 = arith.divf %16, %17 : vector<1x16xf32>
    %c0_15 = arith.constant 0 : index
    %c0_16 = arith.constant 0 : index
    %c0_17 = arith.constant 0 : index
    %19 = vector.load %arg1[%c0_15, %c0_16, %c0_17] : memref<1x16x256xf32, #tpu.memory_space<vmem>>, vector<1x16x256xf32>
    %20 = vector.shape_cast %18 : vector<1x16xf32> to vector<1x16x1xf32>
    %21 = vector.broadcast %20 : vector<1x16x1xf32> to vector<1x16x256xf32>
    %22 = arith.mulf %19, %21 : vector<1x16x256xf32>
    %c0_18 = arith.constant 0 : index
    %c0_19 = arith.constant 0 : index
    %c0_20 = arith.constant 0 : index
    %23 = vector.load %arg6[%c0_18, %c0_19, %c0_20] : memref<1x16x256xf32, #tpu.memory_space<vmem>>, vector<1x16x256xf32>
    tpu.vector_store %arg6[%c0_18, %c0_19, %c0_20], %22 {strides = array<i32>} : memref<1x16x256xf32, #tpu.memory_space<vmem>>, vector<1x16x256xf32>,
    return
  }
  func.func @transform_0(%arg0: i32) -> (i32, i32, i32) {
    %c0_i32 = arith.constant 0 : i32
    %c0_i32_0 = arith.constant 0 : i32
    %c0_i32_1 = arith.constant 0 : i32
    return %arg0, %c0_i32, %c0_i32_0 : i32, i32, i32
  }
  func.func @transform_1(%arg0: i32) -> (i32, i32) {
    %c0_i32 = arith.constant 0 : i32
    %c0_i32_0 = arith.constant 0 : i32
    %c0_i32_1 = arith.constant 0 : i32
    return %c0_i32, %c0_i32_0 : i32, i32
  }
  func.func @transform_2(%arg0: i32) -> (i32, i32) {
    %c0_i32 = arith.constant 0 : i32
    %c0_i32_0 = arith.constant 0 : i32
    %c0_i32_1 = arith.constant 0 : i32
    return %c0_i32, %c0_i32_0 : i32, i32
  }
  func.func @transform_3(%arg0: i32) -> (i32, i32) {
    %c0_i32 = arith.constant 0 : i32
    %c0_i32_0 = arith.constant 0 : i32
    %c0_i32_1 = arith.constant 0 : i32
    return %c0_i32, %c0_i32_0 : i32, i32
  }
  func.func @transform_4(%arg0: i32) -> (i32, i32) {
    %c0_i32 = arith.constant 0 : i32
    %c0_i32_0 = arith.constant 0 : i32
    %c0_i32_1 = arith.constant 0 : i32
    return %c0_i32, %c0_i32_0 : i32, i32
  }
  func.func @transform_5(%arg0: i32) -> (i32, i32, i32) {
    %c0_i32 = arith.constant 0 : i32
    %c0_i32_0 = arith.constant 0 : i32
    %c0_i32_1 = arith.constant 0 : i32
    return %arg0, %c0_i32, %c0_i32_0 : i32, i32, i32
  }
}

</mosaic_0001>

<llo_original>
// kernel: tpu_custom_call.1
$region0: #{tpu_custom_call.1}
  #allocation0 [shape = 'u32[]', space=smem, size = 0x4, offset = 0x4, fixed_abs, tag = 'smem constant byte address 0x4 - core index']
  #allocation1 [shape = 'u32[72,128]{1,0:T(1,128)}', space=vmem, size = 0x9000, scoped, tag = 'internal scratch']
  %s0 = inlined_call_operand.hbm [shape: f32[2,16,256], index: 0, kind: input, shape index: {}]
  %s1 = inlined_call_operand.vmem [shape: f32[16,4], index: 1, kind: input, shape index: {}]
  %s2 = inlined_call_operand.vmem [shape: f32[1,4], index: 2, kind: input, shape index: {}]
  %s3 = inlined_call_operand.vmem [shape: f32[4,16], index: 3, kind: input, shape index: {}]
  %s4 = inlined_call_operand.vmem [shape: f32[1,16], index: 4, kind: input, shape index: {}]
  %s5 = inlined_call_operand.hbm [shape: f32[2,16,256], index: 5, kind: output, shape index: {}]
  %s6 = sld [smem:[#allocation0]]
  $region57: #{tpu_custom_call.1} parent=0
    _
  %s8 = ssub.s32 1, %s6
  %s9 = scalar_select 0, %s8, %s6
  $region1: #{tpu_custom_call.1} parent=0
    #allocation2 [shape = 'u8[32768]{0}', space=vmem, size = 0x8000, scoped, tag = 'input window, operand 0']
    #allocation3 [shape = 's32[2]{0}', space=sflag, size = 0x8, scoped, tag = 'scoped memory for tpu_custom_call.1']
    #allocation4 [shape = 's32[2]{0}', space=sflag, size = 0x8, scoped, tag = 'scoped memory for tpu_custom_call.1']
    #allocation5 [shape = 'u8[32768]{0}', space=vmem, size = 0x8000, scoped, tag = 'output window, operand 0']
    %10 = vsyncpa [#allocation3], 0
    %s11 = scalar_lea.sflag [#allocation3], 1
    %12 = vsyncpa %s11, 0
    %13 = vsyncpa [#allocation4], 0
    %s14 = scalar_lea.sflag [#allocation4], 1
    %15 = vsyncpa %s14, 0
    loop: start=0, step=1, limit=4
    $region2: #{tpu_custom_call.1} parent=1 // loop_pre_header
      _
    $region3: #{tpu_custom_call.1} parent=1 // loop_header
      %s17 = sphi 0, %s21
      %p18 = scmp.ge.s32.totalorder %s17, 4
      %s27 = sphi 0, %s29
      %s30 = sphi 0, %s27
      %s31 = sphi 0, %s30
      %s47 = sphi 0, %s31
      %s51 = sphi 0, %s51
      %s53 = sphi 0, %s51
      %s54 = sphi 0, %s53
      %s68 = sphi 0, %s54
      %s72 = sphi 0, %s72
      %s74 = sphi 0, %s72
      %s75 = sphi 0, %s74
      %s89 = sphi 0, %s75
      %s93 = sphi 0, %s93
      %s95 = sphi 0, %s93
      %s96 = sphi 0, %s95
      %s110 = sphi 0, %s96
      %s114 = sphi 0, %s114
      %s116 = sphi 0, %s114
      %s117 = sphi 0, %s116
      %s131 = sphi 0, %s117
      %s137 = sphi 0, %s139
      %s140 = sphi 0, %s137
      %s141 = sphi 0, %s140
      %s157 = sphi 0, %s141
    $region4: #{tpu_custom_call.1} parent=1 // loop_header_branch
      %20 = sbr.rel (%p18) target = $region8
    $region5: #{tpu_custom_call.1} parent=1 // loop_body
      %s22 = ssub.s32 %s17, 1
      %s23 = ssub.s32 %s17, 2
      %s24 = sadd.s32 %s17, 1
      %s25 = ssub.s32 %s17, %s24
      %p26 = scmp.eq.s32.totalorder %s25, 0
      %s28 = sadd.s32 %s27, 1
      %s29 = scalar_select %p26, %s27, %s28
      %p32 = pneg %p26
      %p33 = scmp.eq.s32.totalorder %s17, 1
      %p34 = por %p32, %p33
      %p35 = scmp.ne.s32.totalorder %s27, %s30
      %p36 = scmp.eq.s32.totalorder %s17, 0
      %p37 = por %p35, %p36
      %p38 = scmp.ne.s32.totalorder %s27, %s30
      %p39 = scmp.eq.s32.totalorder %s22, 1
      %p40 = por %p38, %p39
      %p41 = scmp.ne.s32.totalorder %s30, %s31
      %p42 = scmp.eq.s32.totalorder %s22, 0
      %p43 = por %p41, %p42
      %p44 = scmp.ne.s32.totalorder %s30, %s31
      %p45 = scmp.eq.s32.totalorder %s23, 1
      %p46 = por %p44, %p45
      %p48 = scmp.ne.s32.totalorder %s31, %s47
      %p49 = scmp.eq.s32.totalorder %s23, 0
      %p50 = por %p48, %p49
      %s52 = sadd.s32 %s51, 1
      %p55 = scmp.eq.s32.totalorder %s17, 1
      %p56 = scmp.ne.s32.totalorder %s51, %s53
      %p57 = scmp.eq.s32.totalorder %s17, 0
      %p58 = por %p56, %p57
      %p59 = scmp.ne.s32.totalorder %s51, %s53
      %p60 = scmp.eq.s32.totalorder %s22, 1
      %p61 = por %p59, %p60
      %p62 = scmp.ne.s32.totalorder %s53, %s54
      %p63 = scmp.eq.s32.totalorder %s22, 0
      %p64 = por %p62, %p63
      %p65 = scmp.ne.s32.totalorder %s53, %s54
      %p66 = scmp.eq.s32.totalorder %s23, 1
      %p67 = por %p65, %p66
      %p69 = scmp.ne.s32.totalorder %s54, %s68
      %p70 = scmp.eq.s32.totalorder %s23, 0
      %p71 = por %p69, %p70
      %s73 = sadd.s32 %s72, 1
      %p76 = scmp.eq.s32.totalorder %s17, 1
      %p77 = scmp.ne.s32.totalorder %s72, %s74
      %p78 = scmp.eq.s32.totalorder %s17, 0
      %p79 = por %p77, %p78
      %p80 = scmp.ne.s32.totalorder %s72, %s74
      %p81 = scmp.eq.s32.totalorder %s22, 1
      %p82 = por %p80, %p81
      %p83 = scmp.ne.s32.totalorder %s74, %s75
      %p84 = scmp.eq.s32.totalorder %s22, 0
      %p85 = por %p83, %p84
      %p86 = scmp.ne.s32.totalorder %s74, %s75
      %p87 = scmp.eq.s32.totalorder %s23, 1
      %p88 = por %p86, %p87
      %p90 = scmp.ne.s32.totalorder %s75, %s89
      %p91 = scmp.eq.s32.totalorder %s23, 0
      %p92 = por %p90, %p91
      %s94 = sadd.s32 %s93, 1
      %p97 = scmp.eq.s32.totalorder %s17, 1
      %p98 = scmp.ne.s32.totalorder %s93, %s95
      %p99 = scmp.eq.s32.totalorder %s17, 0
      %p100 = por %p98, %p99
      %p101 = scmp.ne.s32.totalorder %s93, %s95
      %p102 = scmp.eq.s32.totalorder %s22, 1
      %p103 = por %p101, %p102
      %p104 = scmp.ne.s32.totalorder %s95, %s96
      %p105 = scmp.eq.s32.totalorder %s22, 0
      %p106 = por %p104, %p105
      %p107 = scmp.ne.s32.totalorder %s95, %s96
      %p108 = scmp.eq.s32.totalorder %s23, 1
      %p109 = por %p107, %p108
      %p111 = scmp.ne.s32.totalorder %s96, %s110
      %p112 = scmp.eq.s32.totalorder %s23, 0
      %p113 = por %p111, %p112
      %s115 = sadd.s32 %s114, 1
      %p118 = scmp.eq.s32.totalorder %s17, 1
      %p119 = scmp.ne.s32.totalorder %s114, %s116
      %p120 = scmp.eq.s32.totalorder %s17, 0
      %p121 = por %p119, %p120
      %p122 = scmp.ne.s32.totalorder %s114, %s116
      %p123 = scmp.eq.s32.totalorder %s22, 1
      %p124 = por %p122, %p123
      %p125 = scmp.ne.s32.totalorder %s116, %s117
      %p126 = scmp.eq.s32.totalorder %s22, 0
      %p127 = por %p125, %p126
      %p128 = scmp.ne.s32.totalorder %s116, %s117
      %p129 = scmp.eq.s32.totalorder %s23, 1
      %p130 = por %p128, %p129
      %p132 = scmp.ne.s32.totalorder %s117, %s131
      %p133 = scmp.eq.s32.totalorder %s23, 0
      %p134 = por %p132, %p133
      %s135 = ssub.s32 %s17, %s24
      %p136 = scmp.eq.s32.totalorder %s135, 0
      %s138 = sadd.s32 %s137, 1
      %s139 = scalar_select %p136, %s137, %s138
      %p142 = pneg %p136
      %p143 = scmp.eq.s32.totalorder %s17, 1
      %p144 = por %p142, %p143
      %p145 = scmp.ne.s32.totalorder %s137, %s140
      %p146 = scmp.eq.s32.totalorder %s17, 0
      %p147 = por %p145, %p146
      %p148 = scmp.ne.s32.totalorder %s137, %s140
      %p149 = scmp.eq.s32.totalorder %s22, 1
      %p150 = por %p148, %p149
      %p151 = scmp.ne.s32.totalorder %s140, %s141
      %p152 = scmp.eq.s32.totalorder %s22, 0
      %p153 = por %p151, %p152
      %p154 = scmp.ne.s32.totalorder %s140, %s141
      %p155 = scmp.eq.s32.totalorder %s23, 1
      %p156 = por %p154, %p155
      %p158 = scmp.ne.s32.totalorder %s141, %s157
      %p159 = scmp.eq.s32.totalorder %s23, 0
      %p160 = por %p158, %p159
      %p161 = scmp.le.s32.totalorder 1, %s17
      %p162 = scmp.lt.s32.totalorder %s17, 3
      %p163 = pnand %p161, %p162
      %p164 = pneg %p163
      // Predicated region
      $region9: #{tpu_custom_call.1} parent=5 // pred_check
        _
      $region10: #{tpu_custom_call.1} parent=5 // pred_check_branch
        %166 = sbr.rel (%p163) target = $region12
      $region11: #{tpu_custom_call.1} parent=5 // pred_region
        %s167 = ssub.s32 %s17, 1
        // Predicated region
        $region13: #{tpu_custom_call.1} parent=11 // pred_check
          %p168 = pneg %p64
        $region14: #{tpu_custom_call.1} parent=11 // pred_check_branch
          %170 = sbr.rel (%p168) target = $region16
        $region15: #{tpu_custom_call.1} parent=11 // pred_region
          _
        $region16: #{tpu_custom_call.1} parent=11 // pred_fallthru
          _
        // Predicated region
        $region17: #{tpu_custom_call.1} parent=11 // pred_check
          %p171 = pneg %p85
        $region18: #{tpu_custom_call.1} parent=11 // pred_check_branch
          %173 = sbr.rel (%p171) target = $region20
        $region19: #{tpu_custom_call.1} parent=11 // pred_region
          _
        $region20: #{tpu_custom_call.1} parent=11 // pred_fallthru
          _
        // Predicated region
        $region21: #{tpu_custom_call.1} parent=11 // pred_check
          %p174 = pneg %p106
        $region22: #{tpu_custom_call.1} parent=11 // pred_check_branch
          %176 = sbr.rel (%p174) target = $region24
        $region23: #{tpu_custom_call.1} parent=11 // pred_region
          _
        $region24: #{tpu_custom_call.1} parent=11 // pred_fallthru
          _
        // Predicated region
        $region25: #{tpu_custom_call.1} parent=11 // pred_check
          %p177 = pneg %p127
        $region26: #{tpu_custom_call.1} parent=11 // pred_check_branch
          %179 = sbr.rel (%p177) target = $region28
        $region27: #{tpu_custom_call.1} parent=11 // pred_region
          _
        $region28: #{tpu_custom_call.1} parent=11 // pred_fallthru
          _
      $region12: #{tpu_custom_call.1} parent=5 // pred_fallthru
        _
      %p180 = scmp.lt.s32.totalorder %s17, 2
      // Predicated region
      $region29: #{tpu_custom_call.1} parent=5 // pred_check
        %p181 = pneg %p180
      $region30: #{tpu_custom_call.1} parent=5 // pred_check_branch
        %183 = sbr.rel (%p181) target = $region32
      $region31: #{tpu_custom_call.1} parent=5 // pred_region
        // Predicated region
        $region33: #{tpu_custom_call.1} parent=31 // pred_check
          %p184 = pneg %p37
        $region34: #{tpu_custom_call.1} parent=31 // pred_check_branch
          %186 = sbr.rel (%p184) target = $region36
        $region35: #{tpu_custom_call.1} parent=31 // pred_region
          %s187 = sand.u32 %s27, 1
          %s188 = scalar_lea.sflag [#allocation3], %s187
          %s189 = sand.u32 %s27, 1
          %s190 = smul.addr %s189, 32
          %s191 = scalar_lea.vmem [#allocation2], %s190
          %193 = vsyncadd %s188, 0
          %s194 = smul.addr %s17, 4
          %s195 = smul.addr %s194, 8
          %s196 = scalar_lea.hbm %s0, %s195
          %s197 = sshll.u32 %s196, 4
          %s198 = int_to_ptr.hbm [resolvable:$true] %s197
          %s199 = sshll.u32 %s191, 4
          %s200 = int_to_ptr.vmem [resolvable:$true] %s199
          %205 = dma.hbm_to_vmem [thread:$0]  %s198, 512, %s200, %s188, 256, 256, 16
        $region36: #{tpu_custom_call.1} parent=31 // pred_fallthru
          _
      $region32: #{tpu_custom_call.1} parent=5 // pred_fallthru
        _
      %p206 = scmp.le.s32.totalorder 1, %s17
      %p207 = scmp.lt.s32.totalorder %s17, 3
      %p208 = pnand %p206, %p207
      %p209 = pneg %p208
      // Predicated region
      $region37: #{tpu_custom_call.1} parent=5 // pred_check
        _
      $region38: #{tpu_custom_call.1} parent=5 // pred_check_branch
        %211 = sbr.rel (%p208) target = $region40
      $region39: #{tpu_custom_call.1} parent=5 // pred_region
        %s212 = ssub.s32 %s17, 1
        %s213 = sand.u32 %s30, 1
        %s214 = scalar_lea.sflag [#allocation3], %s213
        %s215 = sand.u32 %s30, 1
        %s216 = smul.addr %s215, 32
        %s217 = scalar_lea.vmem [#allocation2], %s216
        // Predicated region
        $region41: #{tpu_custom_call.1} parent=39 // pred_check
          %p218 = pneg %p43
        $region42: #{tpu_custom_call.1} parent=39 // pred_check_branch
          %220 = sbr.rel (%p218) target = $region44
        $region43: #{tpu_custom_call.1} parent=39 // pred_region
          %222 = dma.done %s214, 512
        $region44: #{tpu_custom_call.1} parent=39 // pred_fallthru
          _
        %s223 = sand.u32 %s30, 1
        %s224 = scalar_lea.sflag [#allocation3], %s223
        %s225 = sand.u32 %s30, 1
        %s226 = smul.addr %s225, 32
        %s227 = scalar_lea.vmem [#allocation2], %s226
        %p228 = pneg %p43
        %p229 = pneg %p40
        %p230 = pneg %p64
        %p231 = pneg %p61
        %p232 = pneg %p85
        %p233 = pneg %p82
        %p234 = pneg %p106
        %p235 = pneg %p103
        %p236 = pneg %p127
        %p237 = pneg %p124
        %p238 = pneg %p153
        %p239 = pneg %p150
        %s240 = sand.u32 %s140, 1
        %s241 = scalar_lea.sflag [#allocation4], %s240
        %s242 = sand.u32 %s140, 1
        %s243 = smul.addr %s242, 32
        %s244 = scalar_lea.vmem [#allocation5], %s243
        %v245 = vld [vmem:[%s217] sm:$0xff]
        %v246 = vld [vmem:[%s217 + $0x8] sm:$0xff]
        %v247 = vld [vmem:[%s217 + $0x10] sm:$0xff]
        %v248 = vld [vmem:[%s217 + $0x18] sm:$0xff]
        %v249 = vadd.f32 %v245, %v246
        %250 = vadd.xlane.f32.xlu0 %v249
        %v251 = vpop.xlane.xlu0 %250
        %v252 = vadd.f32 %v247, %v248
        %253 = vadd.xlane.f32.xlu0 %v252
        %v254 = vpop.xlane.xlu0 %253
        %v255 = vmul.f32 %v251, 0.00390625
        %v256 = vmul.f32 %v254, 0.00390625
        %v257 = vld [vmem:[%s1] sm:$0xff]
        %v258 = vld [vmem:[%s1 + $0x8] sm:$0xff]
        %v259 = vld [vmem:[%s2] sm:$0x1]
        %v262 = vlaneseq
        %v263 = vand.u32 %v262, 127
        %v264 = vperm.slane %v255, %v263
        %v265 = vadd.s32 %v263, 4294967288
        %v266 = vperm.slane %v256, %v265
        %vm267 = vcmask 130112
        %v268 = vsel %vm267, %v266, %v264
        %vm269 = vcmask 130048
        %v270 = vsel %vm269, %v268, 0
        %272 = vmatpush.msra.mxu0 0.0
        %273 = vmatpush.msra.mxu0 0.0
        %274 = vmatpush.msra.mxu0 0.0
        %275 = vmatpush.msra.mxu0 0.0
        %276 = vmatpush.msra.mxu0 0.0
        %277 = vmatpush.msra.mxu0 0.0
        %278 = vmatpush.msra.mxu0 0.0
        %279 = vmatpush.msra.mxu0 0.0
        %280 = vmatpush.msra.mxu0 0.0
        %281 = vmatpush.msra.mxu0 0.0
        %282 = vmatpush.msra.mxu0 0.0
        %283 = vmatpush.msra.mxu0 0.0
        %284 = vmatpush.msra.mxu0 0.0
        %285 = vmatpush.msra.mxu0 0.0
        %286 = vmatpush.msra.mxu0 %v258
        %287 = vmatpush.msra.mxu0 %v257
        %288 = vmatmul.f32.gmra.mxu0 %v270
        %v289 = vpop.f32.mrf.mxu0
        %v290 = vadd.f32 %v259, %v289
        %291 = vdwg.mxu0
        %v292 = vmax.f32 %v290, 0.0
        %v293 = vld [vmem:[%s3] sm:$0xf]
        %v294 = vld [vmem:[%s4] sm:$0x1]
        %vm295 = vcmask 31744
        %v297 = vsel %vm295, %v292, 0
        %vm299 = vcmask 1043456
        %v301 = vsel %vm299, %v293, 0
        %303 = vmatpush.msra.mxu0 0.0
        %304 = vmatpush.msra.mxu0 0.0
        %305 = vmatpush.msra.mxu0 0.0
        %306 = vmatpush.msra.mxu0 0.0
        %307 = vmatpush.msra.mxu0 0.0
        %308 = vmatpush.msra.mxu0 0.0
        %309 = vmatpush.msra.mxu0 0.0
        %310 = vmatpush.msra.mxu0 0.0
        %311 = vmatpush.msra.mxu0 0.0
        %312 = vmatpush.msra.mxu0 0.0
        %313 = vmatpush.msra.mxu0 0.0
        %314 = vmatpush.msra.mxu0 0.0
        %315 = vmatpush.msra.mxu0 0.0
        %316 = vmatpush.msra.mxu0 0.0
        %317 = vmatpush.msra.mxu0 0.0
        %318 = vmatpush.msra.mxu0 %v301
        %319 = vmatmul.f32.gmra.mxu0 %v297
        %v320 = vpop.f32.mrf.mxu0
        %v321 = vadd.f32 %v294, %v320
        %322 = vdwg.mxu0
        %v323 = vxor.u32 %v321, 2147483648
        %v324 = vmul.f32 %v323, 1.442695
        %v325 = vpow.pop %v324
        %v326 = vadd.f32 %v325, 1.0
        %v327 = vrcp.pop %v326
        %v328 = vmul.f32 %v326, %v327
        %v329 = vsub.f32 1.0, %v328
        %v330 = vmul.f32 %v327, %v329
        %v331 = vadd.f32 %v327, %v330
        %vm332 = vweird.f32 %v326
        %vm333 = vweird.f32 %v327
        %vm334 = vmor %vm332, %vm333
        %v335 = vsel %vm334, %v327, %v331
        %v336 = vand.u32 2147483647, %v326
        %vm337 = vcmp.eq.f32.partialorder %v336, 8.507059e+37
        %v338 = vand.u32 %v326, 2147483648
        %v339 = vor.u32 1.1754944e-38, %v338
        %v340 = vsel %vm337, %v339, %v335
        %v341 = vmul.f32 1.0, %v340
        %v342 = vperm.slane %v341, 0
        %v343 = vlaneseq
        %v344 = vshrl.u32 %v343, 7
        %346 = vset.pattern.permute.xlu0 %v344
        %347 = vperm.xlu0 %346, %v342
        %v348 = vpop.permute.xlu0 %347
        %v349 = vlaneseq
        %v350 = vshrl.u32 %v349, 7
        %v351 = vadd.s32 %v350, 8
        %352 = vset.pattern.permute.xlu0 %v351
        %353 = vperm.xlu0 %352, %v342
        %v354 = vpop.permute.xlu0 %353
        %v355 = vmul.f32 %v245, %v348
        %v356 = vmul.f32 %v246, %v348
        %v357 = vmul.f32 %v247, %v354
        %v358 = vmul.f32 %v248, %v354
        %359 = vst [vmem:[%s244] sm:$0xff] %v355
        %360 = vst [vmem:[%s244 + $0x8] sm:$0xff] %v356
        %361 = vst [vmem:[%s244 + $0x10] sm:$0xff] %v357
        %362 = vst [vmem:[%s244 + $0x18] sm:$0xff] %v358
        %s363 = sand.u32 %s140, 1
        %s364 = scalar_lea.sflag [#allocation4], %s363
        %s365 = sand.u32 %s140, 1
        %s366 = smul.addr %s365, 32
        %s367 = scalar_lea.vmem [#allocation5], %s366
        // Predicated region
        $region45: #{tpu_custom_call.1} parent=39 // pred_check
          %p368 = pneg %p150
        $region46: #{tpu_custom_call.1} parent=39 // pred_check_branch
          %370 = sbr.rel (%p368) target = $region48
        $region47: #{tpu_custom_call.1} parent=39 // pred_region
          %372 = vsyncadd %s364, 0
          %s373 = smul.addr %s22, 4
          %s374 = smul.addr %s373, 8
          %s375 = scalar_lea.hbm %s5, %s374
          %s376 = sshll.u32 %s367, 4
          %s377 = int_to_ptr.vmem [resolvable:$true] %s376
          %s378 = sshll.u32 %s375, 4
          %s379 = int_to_ptr.hbm [resolvable:$true] %s378
          %384 = dma.vmem_to_hbm [thread:$0]  %s377, 512, %s379, %s364, 256, 256, 16
        $region48: #{tpu_custom_call.1} parent=39 // pred_fallthru
          _
      $region40: #{tpu_custom_call.1} parent=5 // pred_fallthru
        _
      %p385 = scmp.le.s32.totalorder 2, %s17
      // Predicated region
      $region49: #{tpu_custom_call.1} parent=5 // pred_check
        %p386 = pneg %p385
      $region50: #{tpu_custom_call.1} parent=5 // pred_check_branch
        %388 = sbr.rel (%p386) target = $region52
      $region51: #{tpu_custom_call.1} parent=5 // pred_region
        %s389 = ssub.s32 %s17, 2
        // Predicated region
        $region53: #{tpu_custom_call.1} parent=51 // pred_check
          %p390 = pneg %p156
        $region54: #{tpu_custom_call.1} parent=51 // pred_check_branch
          %392 = sbr.rel (%p390) target = $region56
        $region55: #{tpu_custom_call.1} parent=51 // pred_region
          %s393 = sand.u32 %s141, 1
          %s394 = scalar_lea.sflag [#allocation4], %s393
          %s395 = sand.u32 %s141, 1
          %s396 = smul.addr %s395, 32
          %s397 = scalar_lea.vmem [#allocation5], %s396
          %399 = dma.done %s394, 512
        $region56: #{tpu_custom_call.1} parent=51 // pred_fallthru
          _
      $region52: #{tpu_custom_call.1} parent=5 // pred_fallthru
        _
    $region6: #{tpu_custom_call.1} parent=1 // loop_footer
      %s21 = sadd.s32 1, %s17
    $region7: #{tpu_custom_call.1} parent=1 // loop_footer_branch
      %16 = sbr.rel target = $region3
    $region8: #{tpu_custom_call.1} parent=1 // loop_exit
      _
    %400 = vsyncpa [#allocation3], 1
    %s401 = scalar_lea.sflag [#allocation3], 1
    %402 = vsyncpa %s401, 1
    %403 = vsyncpa [#allocation4], 1
    %s404 = scalar_lea.sflag [#allocation4], 1
    %405 = vsyncpa %s404, 1

</llo_original>
